<compile_context>
chip_gen: v5e
topology: v5e:2x2
jax: 0.10.0
libtpu: 0.0.40
codegen_flags: <defaults>
</compile_context>

<pallas_src>
import jax
import jax.numpy as jnp
from jax import lax
from jax.experimental import pallas as pl
from jax.experimental.pallas import tpu as pltpu


def self_attention_kernel(gamma_ref,            # SMEM (1, 1)
                          x_ref,                # VMEM (1, HW, C) f32
                          m_ref,                # VMEM (C, C)  bf16  (Wq^T Wk)
                          rb_ref,               # VMEM (1, C)  f32   (bq^T Wk)
                          wvT_ref,              # VMEM (C, C)  bf16  (Wv^T)
                          bv_ref,               # VMEM (1, C)  f32
                          o_ref,                # VMEM (1, TQ, C) f32
                          v_scratch):           # VMEM (HW, C) bf16 scratch
    qi = pl.program_id(1)
    TQ = o_ref.shape[1]

    x_full = x_ref[0]                                   # (HW, C) f32
    x_full_b = x_full.astype(jnp.bfloat16)

    # Value projection: compute once per batch element, cache across q-tiles.
    @pl.when(qi == 0)
    def _():
        v = jnp.dot(x_full_b, wvT_ref[...],
                    preferred_element_type=jnp.float32) + bv_ref[...]
        v_scratch[...] = v.astype(jnp.bfloat16)

    start = pl.multiple_of(qi * TQ, TQ)
    x_tile = x_ref[0, pl.ds(start, TQ), :]              # (TQ, C) f32 (residual)
    x_tile_b = x_tile.astype(jnp.bfloat16)

    # Folded q/k: t_i = x_i^T Wq^T Wk + bq^T Wk ;  s_ij = t_i . x_j
    # (per-row-i constant terms dropped; softmax over j is invariant to them).
    t = jnp.dot(x_tile_b, m_ref[...],
                preferred_element_type=jnp.float32) + rb_ref[...]   # (TQ, C) f32
    s = lax.dot_general(t.astype(jnp.bfloat16), x_full_b,
                        dimension_numbers=(((1,), (1,)), ((), ())),
                        preferred_element_type=jnp.float32)          # (TQ, HW)

    # Row-wise softmax over the full key axis (exact, no online machinery).
    s = s - jnp.max(s, axis=-1, keepdims=True)
    p = jnp.exp(s)
    p = p * pl.reciprocal(jnp.sum(p, axis=-1, keepdims=True), approx=True)

    out = jnp.dot(p.astype(jnp.bfloat16), v_scratch[...],
                  preferred_element_type=jnp.float32)                # (TQ, C)

    gamma = gamma_ref[0, 0]
    o_ref[0] = gamma * out + x_tile


def _choose_tq(hw):
    # Largest q-tile (multiple of 8, <= 256) that evenly divides HW.  Per-step
    # overhead (~0.35 us) argues for big tiles; the (TQ, HW) score block plus
    # resident x/V caps it (re-derive for v7x's 64 MiB VMEM).
    for cand in (256, 128, 64, 32, 16, 8):
        if hw % cand == 0:
            return cand
    return hw


def _default_vmem_limit():
    try:
        cap = pltpu.get_tpu_info().vmem_capacity_bytes
    except Exception:
        return 48 * 1024 * 1024
    if cap >= 128 * 1024 * 1024:
        return 96 * 1024 * 1024      # v5e / v6e (128 MiB physical)
    return 48 * 1024 * 1024          # v7x-class (64 MiB physical)


def self_attention_pallas(x_nchw, params, tq=None, vmem_limit_bytes=None):
    """x_nchw: (B, C, H, W) float32. params: dict of weights. Returns (B, C, H, W)."""
    B, C, H, W = x_nchw.shape
    HW = H * W

    if tq is None:
        tq = _choose_tq(HW)
    assert HW % tq == 0 and (tq % 8 == 0 or tq == HW)
    nq = HW // tq

    # NCHW -> (B, HW, C); allow_input_fusion below lets XLA fuse this layout
    # change into the pallas input.  In a real model keep activations
    # channels-last to avoid it entirely.
    x_seq = jnp.transpose(x_nchw.reshape(B, C, HW), (0, 2, 1))

    wq, wk, wv = params["wq"], params["wk"], params["wv"]
    bq, bv = params["bq"], params["bv"]

    # Fold q/k projections (valid because softmax over keys is invariant to
    # per-query constants); weights as bf16 MXU operands.
    m_b = jnp.dot(wq.T, wk).astype(jnp.bfloat16)                 # (C, C)
    rb = jnp.dot(bq, wk).reshape(1, C).astype(jnp.float32)       # (1, C)
    wvT_b = wv.T.astype(jnp.bfloat16)                            # (C, C)
    bv2 = bv.reshape(1, C).astype(jnp.float32)
    gamma = params["gamma"].reshape(1, 1).astype(jnp.float32)

    if vmem_limit_bytes is None:
        vmem_limit_bytes = _default_vmem_limit()

    const = lambda shape: pl.BlockSpec(shape, lambda b, q: tuple(0 for _ in shape))

    out_seq = pl.pallas_call(
        self_attention_kernel,
        out_shape=jax.ShapeDtypeStruct((B, HW, C), jnp.float32),
        grid=(B, nq),
        in_specs=[
            pl.BlockSpec((1, 1), lambda b, q: (0, 0), memory_space=pltpu.SMEM),  # gamma
            pl.BlockSpec((1, HW, C), lambda b, q: (b, 0, 0)),                    # x (full, DMA'd once per b)
            const((C, C)),                                                       # Wq^T Wk
            const((1, C)),                                                       # bq^T Wk
            const((C, C)),                                                       # Wv^T
            const((1, C)),                                                       # bv
        ],
        out_specs=pl.BlockSpec((1, tq, C), lambda b, q: (b, q, 0)),
        scratch_shapes=[pltpu.VMEM((HW, C), jnp.bfloat16)],                      # cached V
        compiler_params=pltpu.CompilerParams(
            # qi axis carries the cached-V scratch dependency -> "arbitrary".
            dimension_semantics=("parallel", "arbitrary"),
            vmem_limit_bytes=vmem_limit_bytes,
            allow_input_fusion=[False, True, False, False, False, False],
        ),
    )(gamma, x_seq, m_b, rb, wvT_b, bv2)

    # (B, HW, C) -> NCHW
    return jnp.transpose(out_seq, (0, 2, 1)).reshape(B, C, H, W)


def self_attention_ref(x_nchw, params):
    """Pure-JAX f32 reference mirroring the PyTorch forward exactly."""
    B, C, H, W = x_nchw.shape
    HW = H * W
    x_flat = x_nchw.reshape(B, C, HW)                                   # (B, C, HW)
    q = jnp.einsum("oc,bcn->bon", params["wq"], x_flat) + params["bq"][None, :, None]
    k = jnp.einsum("oc,bcn->bon", params["wk"], x_flat) + params["bk"][None, :, None]
    v = jnp.einsum("oc,bcn->bon", params["wv"], x_flat) + params["bv"][None, :, None]
    query = jnp.transpose(q, (0, 2, 1))                                 # (B, HW, C8)
    attn = jnp.einsum("bik,bkj->bij", query, k)                         # (B, HW, HW)
    attn = jax.nn.softmax(attn, axis=-1)
    out = jnp.einsum("bcj,bij->bci", v, attn)                           # (B, C, HW)
    out = out.reshape(B, C, H, W)
    return params["gamma"] * out + x_nchw


if __name__ == "__main__":
    B, C, H, W = 2, 32, 16, 16   # HW = 256 -> 2 q-tiles of 128 per batch elem
    C8 = C // 8

    key = jax.random.PRNGKey(0)
    kx, kq, kk, kv, kbq, kbk, kbv = jax.random.split(key, 7)

    x = jax.random.normal(kx, (B, C, H, W), dtype=jnp.float32)

    params = {
        # Conv2d(kernel_size=1) weights squeezed to (out_ch, in_ch).
        "wq": jax.random.normal(kq, (C8, C), dtype=jnp.float32) * 0.1,
        "wk": jax.random.normal(kk, (C8, C), dtype=jnp.float32) * 0.1,
        "wv": jax.random.normal(kv, (C, C), dtype=jnp.float32) * 0.1,
        "bq": jax.random.normal(kbq, (C8,), dtype=jnp.float32) * 0.1,
        "bk": jax.random.normal(kbk, (C8,), dtype=jnp.float32) * 0.1,
        "bv": jax.random.normal(kbv, (C,), dtype=jnp.float32) * 0.1,
        # PyTorch initializes gamma to 0; use a nonzero value so the attention
        # path actually contributes to the checked output.
        "gamma": jnp.array(0.5, dtype=jnp.float32),
    }

    out = jax.block_until_ready(self_attention_pallas(x, params, tq=128))
    ref = jax.block_until_ready(self_attention_ref(x, params))

    assert out.shape == (B, C, H, W)
    # bf16 MXU operands (f32 accumulation) vs. exact f32 reference -> relaxed tol.
    assert jnp.allclose(out, ref, atol=3e-2, rtol=3e-2), "mismatch vs reference"
    print("KERNEL_OK")
</pallas_src>

<mosaic_0001>
module attributes {stable_mosaic.version = 11 : i64} {
  func.func @self_attention_kernel(%arg0: i32, %arg1: i32, %arg2: memref<1x1xf32, #tpu.memory_space<smem>>, %arg3: memref<1x256x32xf32, #tpu.memory_space<vmem>>, %arg4: memref<32x32xbf16, #tpu.memory_space<vmem>>, %arg5: memref<1x32xf32, #tpu.memory_space<vmem>>, %arg6: memref<32x32xbf16, #tpu.memory_space<vmem>>, %arg7: memref<1x32xf32, #tpu.memory_space<vmem>>, %arg8: memref<1x128x32xf32, #tpu.memory_space<vmem>>, %arg9: memref<256x32xbf16, #tpu.memory_space<vmem>>) attributes {dimension_semantics = [#tpu.dimension_semantics<parallel>, #tpu.dimension_semantics<arbitrary>], iteration_bounds = array<i64: 2, 2>, scalar_prefetch = 0 : i64, scratch_operands = 1 : i64, tpu.core_type = #tpu.core_type<tc>, window_params = [{transform_indices = @transform_0, window_bounds = array<i64: 1, 1>}, {transform_indices = @transform_1, window_bounds = array<i64: 1, 256, 32>}, {pipeline_mode = #tpu.pipeline_mode<synchronous>, transform_indices = @transform_2, window_bounds = array<i64: 32, 32>}, {pipeline_mode = #tpu.pipeline_mode<synchronous>, transform_indices = @transform_3, window_bounds = array<i64: 1, 32>}, {pipeline_mode = #tpu.pipeline_mode<synchronous>, transform_indices = @transform_4, window_bounds = array<i64: 32, 32>}, {pipeline_mode = #tpu.pipeline_mode<synchronous>, transform_indices = @transform_5, window_bounds = array<i64: 1, 32>}, {transform_indices = @transform_6, window_bounds = array<i64: 1, 128, 32>}]} {
    %c0 = arith.constant 0 : index
    %c0_0 = arith.constant 0 : index
    %c0_1 = arith.constant 0 : index
    %0 = vector.load %arg3[%c0, %c0_0, %c0_1] : memref<1x256x32xf32, #tpu.memory_space<vmem>>, vector<1x256x32xf32>
    %1 = vector.shape_cast %0 : vector<1x256x32xf32> to vector<256x32xf32>
    %2 = arith.truncf %1 : vector<256x32xf32> to vector<256x32xbf16>
    %c0_i32 = arith.constant 0 : i32
    %3 = arith.cmpi eq, %arg1, %c0_i32 : i32
    %4 = arith.extui %3 : i1 to i32
    %c0_i32_2 = arith.constant 0 : i32
    %5 = arith.cmpi ne, %4, %c0_i32_2 : i32
    scf.if %5 {
      %c0_20 = arith.constant 0 : index
      %c0_21 = arith.constant 0 : index
      %39 = vector.load %arg6[%c0_20, %c0_21] : memref<32x32xbf16, #tpu.memory_space<vmem>>, vector<32x32xbf16>
      %cst_22 = arith.constant dense<0.000000e+00> : vector<256x32xf32>
      %40 = tpu.matmul %2, %39, %cst_22 {dimension_numbers = #tpu.dot_dimension_numbers<[1], [0], [0], [1], [0, 0, 1, 1], [], []>} : vector<256x32xbf16>, vector<32x32xbf16>, vector<256x32xf32> -> vector<256x32xf32>
      %c0_23 = arith.constant 0 : index
      %c0_24 = arith.constant 0 : index
      %41 = vector.load %arg7[%c0_23, %c0_24] : memref<1x32xf32, #tpu.memory_space<vmem>>, vector<1x32xf32>
      %42 = vector.broadcast %41 : vector<1x32xf32> to vector<256x32xf32>
      %43 = arith.addf %40, %42 : vector<256x32xf32>
      %44 = arith.truncf %43 : vector<256x32xf32> to vector<256x32xbf16>
      %c0_25 = arith.constant 0 : index
      %c0_26 = arith.constant 0 : index
      %45 = vector.load %arg9[%c0_25, %c0_26] : memref<256x32xbf16, #tpu.memory_space<vmem>>, vector<256x32xbf16>
      tpu.vector_store %arg9[%c0_25, %c0_26], %44 {strides = array<i32>} : memref<256x32xbf16, #tpu.memory_space<vmem>>, vector<256x32xbf16>,
    } else {
    }
    %c128_i32 = arith.constant 128 : i32
    %6 = arith.muli %arg1, %c128_i32 : i32
    %7 = tpu.assume_multiple %6, 128 : i32
    %c0_3 = arith.constant 0 : index
    %8 = arith.index_cast %7 : i32 to index
    %c0_4 = arith.constant 0 : index
    %9 = vector.load %arg3[%c0_3, %8, %c0_4] : memref<1x256x32xf32, #tpu.memory_space<vmem>>, vector<1x128x32xf32>
    %10 = vector.shape_cast %9 : vector<1x128x32xf32> to vector<128x32xf32>
    %11 = arith.truncf %10 : vector<128x32xf32> to vector<128x32xbf16>
    %c0_5 = arith.constant 0 : index
    %c0_6 = arith.constant 0 : index
    %12 = vector.load %arg4[%c0_5, %c0_6] : memref<32x32xbf16, #tpu.memory_space<vmem>>, vector<32x32xbf16>
    %cst = arith.constant dense<0.000000e+00> : vector<128x32xf32>
    %13 = tpu.matmul %11, %12, %cst {dimension_numbers = #tpu.dot_dimension_numbers<[1], [0], [0], [1], [0, 0, 1, 1], [], []>} : vector<128x32xbf16>, vector<32x32xbf16>, vector<128x32xf32> -> vector<128x32xf32>
    %c0_7 = arith.constant 0 : index
    %c0_8 = arith.constant 0 : index
    %14 = vector.load %arg5[%c0_7, %c0_8] : memref<1x32xf32, #tpu.memory_space<vmem>>, vector<1x32xf32>
    %15 = vector.broadcast %14 : vector<1x32xf32> to vector<128x32xf32>
    %16 = arith.addf %13, %15 : vector<128x32xf32>
    %17 = arith.truncf %16 : vector<128x32xf32> to vector<128x32xbf16>
    %cst_9 = arith.constant dense<0.000000e+00> : vector<128x256xf32>
    %18 = tpu.matmul %17, %2, %cst_9 {dimension_numbers = #tpu.dot_dimension_numbers<[1], [1], [0], [0], [0, 0, 1, 0], [], []>} : vector<128x32xbf16>, vector<256x32xbf16>, vector<128x256xf32> -> vector<128x256xf32>
    %cst_10 = arith.constant dense<0xFF800000> : vector<128xf32>
    %19 = vector.multi_reduction <maximumf>, %18, %cst_10 [1] : vector<128x256xf32> to vector<128xf32>
    %20 = vector.shape_cast %19 : vector<128xf32> to vector<128x1xf32>
    %21 = vector.broadcast %20 : vector<128x1xf32> to vector<128x256xf32>
    %22 = arith.subf %18, %21 : vector<128x256xf32>
    %23 = math.exp %22 : vector<128x256xf32>
    %cst_11 = arith.constant dense<0.000000e+00> : vector<128xf32>
    %24 = vector.multi_reduction <add>, %23, %cst_11 [1] : vector<128x256xf32> to vector<128xf32>
    %25 = vector.shape_cast %24 : vector<128xf32> to vector<128x1xf32>
    %26 = tpu.reciprocal %25 {approx = true} : vector<128x1xf32> -> vector<128x1xf32>
    %27 = vector.broadcast %26 : vector<128x1xf32> to vector<128x256xf32>
    %28 = arith.mulf %23, %27 : vector<128x256xf32>
    %29 = arith.truncf %28 : vector<128x256xf32> to vector<128x256xbf16>
    %c0_12 = arith.constant 0 : index
    %c0_13 = arith.constant 0 : index
    %30 = vector.load %arg9[%c0_12, %c0_13] : memref<256x32xbf16, #tpu.memory_space<vmem>>, vector<256x32xbf16>
    %cst_14 = arith.constant dense<0.000000e+00> : vector<128x32xf32>
    %31 = tpu.matmul %29, %30, %cst_14 {dimension_numbers = #tpu.dot_dimension_numbers<[1], [0], [0], [1], [0, 0, 1, 1], [], []>} : vector<128x256xbf16>, vector<256x32xbf16>, vector<128x32xf32> -> vector<128x32xf32>
    %c0_15 = arith.constant 0 : index
    %c0_16 = arith.constant 0 : index
    %32 = memref.load %arg2[%c0_15, %c0_16] : memref<1x1xf32, #tpu.memory_space<smem>>
    %33 = vector.broadcast %32 : f32 to vector<128x32xf32>
    %34 = arith.mulf %33, %31 : vector<128x32xf32>
    %35 = arith.addf %34, %10 : vector<128x32xf32>
    %c0_17 = arith.constant 0 : index
    %c0_18 = arith.constant 0 : index
    %c0_19 = arith.constant 0 : index
    %36 = vector.load %arg8[%c0_17, %c0_18, %c0_19] : memref<1x128x32xf32, #tpu.memory_space<vmem>>, vector<1x128x32xf32>
    %37 = vector.shape_cast %36 : vector<1x128x32xf32> to vector<128x32xf32>
    %38 = vector.shape_cast %35 : vector<128x32xf32> to vector<1x128x32xf32>
    tpu.vector_store %arg8[%c0_17, %c0_18, %c0_19], %38 {strides = array<i32>} : memref<1x128x32xf32, #tpu.memory_space<vmem>>, vector<1x128x32xf32>,
    return
  }
  func.func @transform_0(%arg0: i32, %arg1: i32) -> (i32, i32) {
    %c0_i32 = arith.constant 0 : i32
    %c0_i32_0 = arith.constant 0 : i32
    %c0_i32_1 = arith.constant 0 : i32
    return %c0_i32, %c0_i32_0 : i32, i32
  }
  func.func @transform_1(%arg0: i32, %arg1: i32) -> (i32, i32, i32) {
    %c0_i32 = arith.constant 0 : i32
    %c0_i32_0 = arith.constant 0 : i32
    %c0_i32_1 = arith.constant 0 : i32
    return %arg0, %c0_i32, %c0_i32_0 : i32, i32, i32
  }
  func.func @transform_2(%arg0: i32, %arg1: i32) -> (i32, i32) {
    %c0_i32 = arith.constant 0 : i32
    %c0_i32_0 = arith.constant 0 : i32
    %c0_i32_1 = arith.constant 0 : i32
    return %c0_i32, %c0_i32_0 : i32, i32
  }
  func.func @transform_3(%arg0: i32, %arg1: i32) -> (i32, i32) {
    %c0_i32 = arith.constant 0 : i32
    %c0_i32_0 = arith.constant 0 : i32
    %c0_i32_1 = arith.constant 0 : i32
    return %c0_i32, %c0_i32_0 : i32, i32
  }
  func.func @transform_4(%arg0: i32, %arg1: i32) -> (i32, i32) {
    %c0_i32 = arith.constant 0 : i32
    %c0_i32_0 = arith.constant 0 : i32
    %c0_i32_1 = arith.constant 0 : i32
    return %c0_i32, %c0_i32_0 : i32, i32
  }
  func.func @transform_5(%arg0: i32, %arg1: i32) -> (i32, i32) {
    %c0_i32 = arith.constant 0 : i32
    %c0_i32_0 = arith.constant 0 : i32
    %c0_i32_1 = arith.constant 0 : i32
    return %c0_i32, %c0_i32_0 : i32, i32
  }
  func.func @transform_6(%arg0: i32, %arg1: i32) -> (i32, i32, i32) {
    %c0_i32 = arith.constant 0 : i32
    %c0_i32_0 = arith.constant 0 : i32
    return %arg0, %arg1, %c0_i32 : i32, i32, i32
  }
}

</mosaic_0001>

<llo_original>
// kernel: tpu_custom_call.1
$region0: #{tpu_custom_call.1}
  #allocation0 [shape = 'u32[]', space=smem, size = 0x4, offset = 0x4, fixed_abs, tag = 'smem constant byte address 0x4 - core index']
  #allocation1 [shape = 'u32[72,128]{1,0:T(1,128)}', space=vmem, size = 0x9000, scoped, tag = 'internal scratch']
  #allocation2 [shape = 'bf16[256,32]{1,0:T(8,128)(2,1)}', space=vmem, size = 0x10000, scoped, tag = 'scratch operand']
  #allocation3 [shape = 'f32[1,1]{1,0:T(1,128)S(6)}', space=smem, size = 0x200, scoped, tag = 'scoped memory for tpu_custom_call.1']
  %s0 = inlined_call_operand.<no memory space> [shape: f32[1,1], index: 0, kind: input, shape index: {}]
  %s1 = inlined_call_operand.vmem [shape: f32[2,256,32], index: 1, kind: input, shape index: {}]
  %s2 = inlined_call_operand.vmem [shape: bf16[32,32], index: 2, kind: input, shape index: {}]
  %s3 = inlined_call_operand.vmem [shape: f32[1,32], index: 3, kind: input, shape index: {}]
  %s4 = inlined_call_operand.vmem [shape: bf16[32,32], index: 4, kind: input, shape index: {}]
  %s5 = inlined_call_operand.vmem [shape: f32[1,32], index: 5, kind: input, shape index: {}]
  %s6 = inlined_call_operand.vmem [shape: f32[2,256,32], index: 6, kind: output, shape index: {}]
  %s7 = sld [smem:[#allocation0]]
  $region61: #{tpu_custom_call.1} parent=0
    _
  %s9 = ssub.s32 1, %s7
  %s10 = scalar_select 0, %s9, %s7
  %11 = sst [smem:[#allocation3]] %s0
  loop: start=0, step=1, limit=6
  $region2: #{tpu_custom_call.1} parent=0 // loop_pre_header
    _
  $region3: #{tpu_custom_call.1} parent=0 // loop_header
    %s13 = sphi 0, %s17
    %p14 = scmp.ge.s32.totalorder %s13, 6
    %s20 = sphi 0, %s32
    %s21 = sphi 0, %s28
    %s22 = sphi 0, %s20
    %s23 = sphi 0, %s21
    %s24 = sphi 0, %s22
    %s25 = sphi 0, %s23
    %s33 = sphi 0, %s33
    %s35 = sphi 0, %s33
    %s36 = sphi 0, %s35
    %s50 = sphi 0, %s36
    %s56 = sphi 0, %s58
    %s59 = sphi 0, %s56
    %s60 = sphi 0, %s59
    %s76 = sphi 0, %s60
    %s80 = sphi 0, %s80
    %s82 = sphi 0, %s80
    %s83 = sphi 0, %s82
    %s97 = sphi 0, %s83
    %s101 = sphi 0, %s101
    %s103 = sphi 0, %s101
    %s104 = sphi 0, %s103
    %s118 = sphi 0, %s104
    %s122 = sphi 0, %s122
    %s124 = sphi 0, %s122
    %s125 = sphi 0, %s124
    %s139 = sphi 0, %s125
    %s143 = sphi 0, %s143
    %s145 = sphi 0, %s143
    %s146 = sphi 0, %s145
    %s160 = sphi 0, %s146
    %s168 = sphi 0, %s170
    %s171 = sphi 0, %s168
    %s172 = sphi 0, %s171
    %s188 = sphi 0, %s172
  $region4: #{tpu_custom_call.1} parent=0 // loop_header_branch
    %16 = sbr.rel (%p14) target = $region8
  $region5: #{tpu_custom_call.1} parent=0 // loop_body
    %s18 = ssub.s32 %s13, 1
    %s19 = ssub.s32 %s13, 2
    %s26 = sadd.s32 1, %s21
    %p27 = scmp.ge.s32.totalorder %s26, 2
    %s28 = scalar_select %p27, 0, %s26
    %s29 = sadd.s32 1, %s20
    %s30 = scalar_select %p27, %s29, %s20
    %p31 = scmp.ge.s32.totalorder %s30, 2
    %s32 = scalar_select %p31, 0, %s30
    %s34 = sadd.s32 %s33, 1
    %p37 = scmp.eq.s32.totalorder %s13, 3
    %p38 = scmp.ne.s32.totalorder %s33, %s35
    %p39 = scmp.eq.s32.totalorder %s13, 0
    %p40 = por %p38, %p39
    %p41 = scmp.ne.s32.totalorder %s33, %s35
    %p42 = scmp.eq.s32.totalorder %s18, 3
    %p43 = por %p41, %p42
    %p44 = scmp.ne.s32.totalorder %s35, %s36
    %p45 = scmp.eq.s32.totalorder %s18, 0
    %p46 = por %p44, %p45
    %p47 = scmp.ne.s32.totalorder %s35, %s36
    %p48 = scmp.eq.s32.totalorder %s19, 3
    %p49 = por %p47, %p48
    %p51 = scmp.ne.s32.totalorder %s36, %s50
    %p52 = scmp.eq.s32.totalorder %s19, 0
    %p53 = por %p51, %p52
    %s54 = ssub.s32 %s20, %s32
    %p55 = scmp.eq.s32.totalorder %s54, 0
    %s57 = sadd.s32 %s56, 1
    %s58 = scalar_select %p55, %s56, %s57
    %p61 = pneg %p55
    %p62 = scmp.eq.s32.totalorder %s13, 3
    %p63 = por %p61, %p62
    %p64 = scmp.ne.s32.totalorder %s56, %s59
    %p65 = scmp.eq.s32.totalorder %s13, 0
    %p66 = por %p64, %p65
    %p67 = scmp.ne.s32.totalorder %s56, %s59
    %p68 = scmp.eq.s32.totalorder %s18, 3
    %p69 = por %p67, %p68
    %p70 = scmp.ne.s32.totalorder %s59, %s60
    %p71 = scmp.eq.s32.totalorder %s18, 0
    %p72 = por %p70, %p71
    %p73 = scmp.ne.s32.totalorder %s59, %s60
    %p74 = scmp.eq.s32.totalorder %s19, 3
    %p75 = por %p73, %p74
    %p77 = scmp.ne.s32.totalorder %s60, %s76
    %p78 = scmp.eq.s32.totalorder %s19, 0
    %p79 = por %p77, %p78
    %s81 = sadd.s32 %s80, 1
    %p84 = scmp.eq.s32.totalorder %s13, 3
    %p85 = scmp.ne.s32.totalorder %s80, %s82
    %p86 = scmp.eq.s32.totalorder %s13, 0
    %p87 = por %p85, %p86
    %p88 = scmp.ne.s32.totalorder %s80, %s82
    %p89 = scmp.eq.s32.totalorder %s18, 3
    %p90 = por %p88, %p89
    %p91 = scmp.ne.s32.totalorder %s82, %s83
    %p92 = scmp.eq.s32.totalorder %s18, 0
    %p93 = por %p91, %p92
    %p94 = scmp.ne.s32.totalorder %s82, %s83
    %p95 = scmp.eq.s32.totalorder %s19, 3
    %p96 = por %p94, %p95
    %p98 = scmp.ne.s32.totalorder %s83, %s97
    %p99 = scmp.eq.s32.totalorder %s19, 0
    %p100 = por %p98, %p99
    %s102 = sadd.s32 %s101, 1
    %p105 = scmp.eq.s32.totalorder %s13, 3
    %p106 = scmp.ne.s32.totalorder %s101, %s103
    %p107 = scmp.eq.s32.totalorder %s13, 0
    %p108 = por %p106, %p107
    %p109 = scmp.ne.s32.totalorder %s101, %s103
    %p110 = scmp.eq.s32.totalorder %s18, 3
    %p111 = por %p109, %p110
    %p112 = scmp.ne.s32.totalorder %s103, %s104
    %p113 = scmp.eq.s32.totalorder %s18, 0
    %p114 = por %p112, %p113
    %p115 = scmp.ne.s32.totalorder %s103, %s104
    %p116 = scmp.eq.s32.totalorder %s19, 3
    %p117 = por %p115, %p116
    %p119 = scmp.ne.s32.totalorder %s104, %s118
    %p120 = scmp.eq.s32.totalorder %s19, 0
    %p121 = por %p119, %p120
    %s123 = sadd.s32 %s122, 1
    %p126 = scmp.eq.s32.totalorder %s13, 3
    %p127 = scmp.ne.s32.totalorder %s122, %s124
    %p128 = scmp.eq.s32.totalorder %s13, 0
    %p129 = por %p127, %p128
    %p130 = scmp.ne.s32.totalorder %s122, %s124
    %p131 = scmp.eq.s32.totalorder %s18, 3
    %p132 = por %p130, %p131
    %p133 = scmp.ne.s32.totalorder %s124, %s125
    %p134 = scmp.eq.s32.totalorder %s18, 0
    %p135 = por %p133, %p134
    %p136 = scmp.ne.s32.totalorder %s124, %s125
    %p137 = scmp.eq.s32.totalorder %s19, 3
    %p138 = por %p136, %p137
    %p140 = scmp.ne.s32.totalorder %s125, %s139
    %p141 = scmp.eq.s32.totalorder %s19, 0
    %p142 = por %p140, %p141
    %s144 = sadd.s32 %s143, 1
    %p147 = scmp.eq.s32.totalorder %s13, 3
    %p148 = scmp.ne.s32.totalorder %s143, %s145
    %p149 = scmp.eq.s32.totalorder %s13, 0
    %p150 = por %p148, %p149
    %p151 = scmp.ne.s32.totalorder %s143, %s145
    %p152 = scmp.eq.s32.totalorder %s18, 3
    %p153 = por %p151, %p152
    %p154 = scmp.ne.s32.totalorder %s145, %s146
    %p155 = scmp.eq.s32.totalorder %s18, 0
    %p156 = por %p154, %p155
    %p157 = scmp.ne.s32.totalorder %s145, %s146
    %p158 = scmp.eq.s32.totalorder %s19, 3
    %p159 = por %p157, %p158
    %p161 = scmp.ne.s32.totalorder %s146, %s160
    %p162 = scmp.eq.s32.totalorder %s19, 0
    %p163 = por %p161, %p162
    %s164 = ssub.s32 %s20, %s32
    %s165 = ssub.s32 %s21, %s28
    %s166 = sor.u32 %s164, %s165
    %p167 = scmp.eq.s32.totalorder %s166, 0
    %s169 = sadd.s32 %s168, 1
    %s170 = scalar_select %p167, %s168, %s169
    %p173 = pneg %p167
    %p174 = scmp.eq.s32.totalorder %s13, 3
    %p175 = por %p173, %p174
    %p176 = scmp.ne.s32.totalorder %s168, %s171
    %p177 = scmp.eq.s32.totalorder %s13, 0
    %p178 = por %p176, %p177
    %p179 = scmp.ne.s32.totalorder %s168, %s171
    %p180 = scmp.eq.s32.totalorder %s18, 3
    %p181 = por %p179, %p180
    %p182 = scmp.ne.s32.totalorder %s171, %s172
    %p183 = scmp.eq.s32.totalorder %s18, 0
    %p184 = por %p182, %p183
    %p185 = scmp.ne.s32.totalorder %s171, %s172
    %p186 = scmp.eq.s32.totalorder %s19, 3
    %p187 = por %p185, %p186
    %p189 = scmp.ne.s32.totalorder %s172, %s188
    %p190 = scmp.eq.s32.totalorder %s19, 0
    %p191 = por %p189, %p190
    %p192 = scmp.le.s32.totalorder 1, %s13
    %p193 = scmp.lt.s32.totalorder %s13, 5
    %p194 = pnand %p192, %p193
    %p195 = pneg %p194
    // Predicated region
    $region9: #{tpu_custom_call.1} parent=5 // pred_check
      _
    $region10: #{tpu_custom_call.1} parent=5 // pred_check_branch
      %197 = sbr.rel (%p194) target = $region12
    $region11: #{tpu_custom_call.1} parent=5 // pred_region
      %s198 = ssub.s32 %s13, 1
      // Predicated region
      $region13: #{tpu_custom_call.1} parent=11 // pred_check
        %p199 = pneg %p46
      $region14: #{tpu_custom_call.1} parent=11 // pred_check_branch
        %201 = sbr.rel (%p199) target = $region16
      $region15: #{tpu_custom_call.1} parent=11 // pred_region
        _
      $region16: #{tpu_custom_call.1} parent=11 // pred_fallthru
        _
      // Predicated region
      $region17: #{tpu_custom_call.1} parent=11 // pred_check
        %p202 = pneg %p93
      $region18: #{tpu_custom_call.1} parent=11 // pred_check_branch
        %204 = sbr.rel (%p202) target = $region20
      $region19: #{tpu_custom_call.1} parent=11 // pred_region
        _
      $region20: #{tpu_custom_call.1} parent=11 // pred_fallthru
        _
      // Predicated region
      $region21: #{tpu_custom_call.1} parent=11 // pred_check
        %p205 = pneg %p114
      $region22: #{tpu_custom_call.1} parent=11 // pred_check_branch
        %207 = sbr.rel (%p205) target = $region24
      $region23: #{tpu_custom_call.1} parent=11 // pred_region
        _
      $region24: #{tpu_custom_call.1} parent=11 // pred_fallthru
        _
      // Predicated region
      $region25: #{tpu_custom_call.1} parent=11 // pred_check
        %p208 = pneg %p135
      $region26: #{tpu_custom_call.1} parent=11 // pred_check_branch
        %210 = sbr.rel (%p208) target = $region28
      $region27: #{tpu_custom_call.1} parent=11 // pred_region
        _
      $region28: #{tpu_custom_call.1} parent=11 // pred_fallthru
        _
      // Predicated region
      $region29: #{tpu_custom_call.1} parent=11 // pred_check
        %p211 = pneg %p156
      $region30: #{tpu_custom_call.1} parent=11 // pred_check_branch
        %213 = sbr.rel (%p211) target = $region32
      $region31: #{tpu_custom_call.1} parent=11 // pred_region
        _
      $region32: #{tpu_custom_call.1} parent=11 // pred_fallthru
        _
    $region12: #{tpu_custom_call.1} parent=5 // pred_fallthru
      _
    %p214 = scmp.lt.s32.totalorder %s13, 4
    // Predicated region
    $region33: #{tpu_custom_call.1} parent=5 // pred_check
      %p215 = pneg %p214
    $region34: #{tpu_custom_call.1} parent=5 // pred_check_branch
      %217 = sbr.rel (%p215) target = $region36
    $region35: #{tpu_custom_call.1} parent=5 // pred_region
      // Predicated region
      $region37: #{tpu_custom_call.1} parent=35 // pred_check
        %p218 = pneg %p66
      $region38: #{tpu_custom_call.1} parent=35 // pred_check_branch
        %220 = sbr.rel (%p218) target = $region40
      $region39: #{tpu_custom_call.1} parent=35 // pred_region
        %p221 = scmp.lt.s32.totalorder %s20, 1
        %s222 = scalar_select %p221, %s20, 1
        %s223 = smul.addr %s222, 32
        %s224 = smul.addr %s223, 8
        %s225 = scalar_lea.vmem %s1, %s224
      $region40: #{tpu_custom_call.1} parent=35 // pred_fallthru
        _
    $region36: #{tpu_custom_call.1} parent=5 // pred_fallthru
      _
    %p226 = scmp.le.s32.totalorder 1, %s13
    %p227 = scmp.lt.s32.totalorder %s13, 5
    %p228 = pnand %p226, %p227
    %p229 = pneg %p228
    // Predicated region
    $region41: #{tpu_custom_call.1} parent=5 // pred_check
      _
    $region42: #{tpu_custom_call.1} parent=5 // pred_check_branch
      %231 = sbr.rel (%p228) target = $region44
    $region43: #{tpu_custom_call.1} parent=5 // pred_region
      %s232 = ssub.s32 %s13, 1
      %p233 = pneg %p46
      %p234 = pneg %p43
      %p235 = scmp.lt.s32.totalorder %s22, 1
      %s236 = scalar_select %p235, %s22, 1
      %s237 = smul.addr %s236, 32
      %s238 = smul.addr %s237, 8
      %s239 = scalar_lea.vmem %s1, %s238
      %p240 = pneg %p72
      %p241 = pneg %p69
      %p242 = pneg %p93
      %p243 = pneg %p90
      %p244 = pneg %p114
      %p245 = pneg %p111
      %p246 = pneg %p135
      %p247 = pneg %p132
      %p248 = pneg %p156
      %p249 = pneg %p153
      %p250 = pneg %p184
      %p251 = pneg %p181
      %s252 = smul.u32 16, %s23
      %p253 = scmp.lt.s32.totalorder %s22, 1
      %s254 = scalar_select %p253, %s22, 1
      %p255 = scmp.lt.s32.totalorder %s252, 31
      %s256 = scalar_select %p255, %s252, 31
      %s257 = smul.addr %s254, 32
      %s258 = sadd.s32 %s256, %s257
      %s259 = smul.addr %s258, 8
      %s260 = scalar_lea.vmem %s6, %s259
      %p261 = scmp.lt.s32.totalorder %s22, 1
      %s262 = scalar_select %p261, %s22, 1
      %s263 = smul.addr %s262, 32
      %s264 = smul.addr %s263, 8
      %s265 = scalar_lea.vmem %s1, %s264
      %s266 = smul.u32 16, %s23
      %p267 = scmp.lt.s32.totalorder %s22, 1
      %s268 = scalar_select %p267, %s22, 1
      %p269 = scmp.lt.s32.totalorder %s266, 31
      %s270 = scalar_select %p269, %s266, 31
      %s271 = smul.addr %s268, 32
      %s272 = sadd.s32 %s270, %s271
      %s273 = smul.addr %s272, 8
      %s274 = scalar_lea.vmem %s6, %s273
      %s275 = smul.u32 16, %s23
      %v277 = vld [vmem:[%s265] sm:$0xff]
      %v278 = vld [vmem:[%s265 + $0x8] sm:$0xff]
      %v279 = vld [vmem:[%s265 + $0x10] sm:$0xff]
      %v280 = vld [vmem:[%s265 + $0x18] sm:$0xff]
      %v281 = vld [vmem:[%s265 + $0x20] sm:$0xff]
      %v282 = vld [vmem:[%s265 + $0x28] sm:$0xff]
      %v283 = vld [vmem:[%s265 + $0x30] sm:$0xff]
      %v284 = vld [vmem:[%s265 + $0x38] sm:$0xff]
      %v285 = vld [vmem:[%s265 + $0x40] sm:$0xff]
      %v286 = vld [vmem:[%s265 + $0x48] sm:$0xff]
      %v287 = vld [vmem:[%s265 + $0x50] sm:$0xff]
      %v288 = vld [vmem:[%s265 + $0x58] sm:$0xff]
      %v289 = vld [vmem:[%s265 + $0x60] sm:$0xff]
      %v290 = vld [vmem:[%s265 + $0x68] sm:$0xff]
      %v291 = vld [vmem:[%s265 + $0x70] sm:$0xff]
      %v292 = vld [vmem:[%s265 + $0x78] sm:$0xff]
      %v293 = vld [vmem:[%s265 + $0x80] sm:$0xff]
      %v294 = vld [vmem:[%s265 + $0x88] sm:$0xff]
      %v295 = vld [vmem:[%s265 + $0x90] sm:$0xff]
      %v296 = vld [vmem:[%s265 + $0x98] sm:$0xff]
      %v297 = vld [vmem:[%s265 + $0xa0] sm:$0xff]
      %v298 = vld [vmem:[%s265 + $0xa8] sm:$0xff]
      %v299 = vld [vmem:[%s265 + $0xb0] sm:$0xff]
      %v300 = vld [vmem:[%s265 + $0xb8] sm:$0xff]
      %v301 = vld [vmem:[%s265 + $0xc0] sm:$0xff]
      %v302 = vld [vmem:[%s265 + $0xc8] sm:$0xff]
      %v303 = vld [vmem:[%s265 + $0xd0] sm:$0xff]
      %v304 = vld [vmem:[%s265 + $0xd8] sm:$0xff]
      %v305 = vld [vmem:[%s265 + $0xe0] sm:$0xff]
      %v306 = vld [vmem:[%s265 + $0xe8] sm:$0xff]
      %v307 = vld [vmem:[%s265 + $0xf0] sm:$0xff]
      %v308 = vld [vmem:[%s265 + $0xf8] sm:$0xff]
      %v309 = vpack.c.bf16 %v278, %v277
      %v310 = vpack.c.bf16 %v280, %v279
      %v311 = vpack.c.bf16 %v282, %v281
      %v312 = vpack.c.bf16 %v284, %v283
      %v313 = vpack.c.bf16 %v286, %v285
      %v314 = vpack.c.bf16 %v288, %v287
      %v315 = vpack.c.bf16 %v290, %v289
      %v316 = vpack.c.bf16 %v292, %v291
      %v317 = vpack.c.bf16 %v294, %v293
      %v318 = vpack.c.bf16 %v296, %v295
      %v319 = vpack.c.bf16 %v298, %v297
      %v320 = vpack.c.bf16 %v300, %v299
      %v321 = vpack.c.bf16 %v302, %v301
      %v322 = vpack.c.bf16 %v304, %v303
      %v323 = vpack.c.bf16 %v306, %v305
      %v324 = vpack.c.bf16 %v308, %v307
      %p325 = scmp.eq.s32.totalorder %s23, 0
      // Predicated region
      $region45: #{tpu_custom_call.1} parent=43 // pred_check
        %p326 = pneg %p325
      $region46: #{tpu_custom_call.1} parent=43 // pred_check_branch
        %328 = sbr.rel (%p326) target = $region48
      $region47: #{tpu_custom_call.1} parent=43 // pred_region
        %v329 = vld [vmem:[%s4] sm:$0xf]
        %v330 = vld [vmem:[%s4 + $0x4] sm:$0xf]
        %v331 = vld [vmem:[%s4 + $0x8] sm:$0xf]
        %v332 = vld [vmem:[%s4 + $0xc] sm:$0xf]
        %v333 = vld [vmem:[%s5] sm:$0x1]
        %v335 = vperm.slane %v333, 0
        %v341 = vunpack.c.l.b16 %v329
        %v342 = vunpack.c.l.b16 %v330
        %v343 = vunpack.c.l.b16 %v331
        %v344 = vunpack.c.l.b16 %v332
        %v345 = vpack.c.b16 %v342, %v341
        %v346 = vpack.c.b16 %v344, %v343
        %vm349 = vcmask 261120
        %v351 = vsel %vm349, %v309, 0
        %v354 = vsel %vm349, %v310, 0
        %v357 = vsel %vm349, %v311, 0
        %v360 = vsel %vm349, %v312, 0
        %v363 = vsel %vm349, %v313, 0
        %v366 = vsel %vm349, %v314, 0
        %v369 = vsel %vm349, %v315, 0
        %v372 = vsel %vm349, %v316, 0
        %v375 = vsel %vm349, %v317, 0
        %v378 = vsel %vm349, %v318, 0
        %v381 = vsel %vm349, %v319, 0
        %v384 = vsel %vm349, %v320, 0
        %v387 = vsel %vm349, %v321, 0
        %v390 = vsel %vm349, %v322, 0
        %v393 = vsel %vm349, %v323, 0
        %v396 = vsel %vm349, %v324, 0
        %398 = vmatpush.bf16.msra.mxu0 0
        %399 = vmatpush.bf16.msra.mxu0 0
        %400 = vmatpush.bf16.msra.mxu0 0
        %401 = vmatpush.bf16.msra.mxu0 0
        %402 = vmatpush.bf16.msra.mxu0 0
        %403 = vmatpush.bf16.msra.mxu0 0
        %404 = vmatpush.bf16.msra.mxu0 %v346
        %405 = vmatpush.bf16.msra.mxu0 %v345
        %406 = vmatmul.bf16.gmra.mxu0 %v351
        %v407 = vpop.f32.mrf.mxu0
        %v408 = vadd.f32 %v335, %v407
        %v409 = vpop.f32.mrf.mxu0
        %v410 = vadd.f32 %v335, %v409
        %411 = vmatmul.bf16.gmra.mxu0 %v354
        %v412 = vpop.f32.mrf.mxu0
        %v413 = vadd.f32 %v335, %v412
        %v414 = vpop.f32.mrf.mxu0
        %v415 = vadd.f32 %v335, %v414
        %416 = vmatmul.bf16.gmra.mxu0 %v357
        %v417 = vpop.f32.mrf.mxu0
        %v418 = vadd.f32 %v335, %v417
        %v419 = vpop.f32.mrf.mxu0
        %v420 = vadd.f32 %v335, %v419
        %421 = vmatmul.bf16.gmra.mxu0 %v360
        %v422 = vpop.f32.mrf.mxu0
        %v423 = vadd.f32 %v335, %v422
        %v424 = vpop.f32.mrf.mxu0
        %v425 = vadd.f32 %v335, %v424
        %426 = vmatmul.bf16.gmra.mxu0 %v363
        %v427 = vpop.f32.mrf.mxu0
        %v428 = vadd.f32 %v335, %v427
        %v429 = vpop.f32.mrf.mxu0
        %v430 = vadd.f32 %v335, %v429
        %431 = vmatmul.bf16.gmra.mxu0 %v366
        %v432 = vpop.f32.mrf.mxu0
        %v433 = vadd.f32 %v335, %v432
        %v434 = vpop.f32.mrf.mxu0
        %v435 = vadd.f32 %v335, %v434
        %436 = vmatmul.bf16.gmra.mxu0 %v369
        %v437 = vpop.f32.mrf.mxu0
        %v438 = vadd.f32 %v335, %v437
        %v439 = vpop.f32.mrf.mxu0
        %v440 = vadd.f32 %v335, %v439
        %441 = vmatmul.bf16.gmra.mxu0 %v372
        %v442 = vpop.f32.mrf.mxu0
        %v443 = vadd.f32 %v335, %v442
        %v444 = vpop.f32.mrf.mxu0
        %v445 = vadd.f32 %v335, %v444
        %446 = vmatmul.bf16.gmra.mxu0 %v375
        %v447 = vpop.f32.mrf.mxu0
        %v448 = vadd.f32 %v335, %v447
        %v449 = vpop.f32.mrf.mxu0
        %v450 = vadd.f32 %v335, %v449
        %451 = vmatmul.bf16.gmra.mxu0 %v378
        %v452 = vpop.f32.mrf.mxu0
        %v453 = vadd.f32 %v335, %v452
        %v454 = vpop.f32.mrf.mxu0
        %v455 = vadd.f32 %v335, %v454
        %456 = vmatmul.bf16.gmra.mxu0 %v381
        %v457 = vpop.f32.mrf.mxu0
        %v458 = vadd.f32 %v335, %v457
        %v459 = vpop.f32.mrf.mxu0
        %v460 = vadd.f32 %v335, %v459
        %461 = vmatmul.bf16.gmra.mxu0 %v384
        %v462 = vpop.f32.mrf.mxu0
        %v463 = vadd.f32 %v335, %v462
        %v464 = vpop.f32.mrf.mxu0
        %v465 = vadd.f32 %v335, %v464
        %466 = vmatmul.bf16.gmra.mxu0 %v387
        %v467 = vpop.f32.mrf.mxu0
        %v468 = vadd.f32 %v335, %v467
        %v469 = vpop.f32.mrf.mxu0
        %v470 = vadd.f32 %v335, %v469
        %471 = vmatmul.bf16.gmra.mxu0 %v390
        %v472 = vpop.f32.mrf.mxu0
        %v473 = vadd.f32 %v335, %v472
        %v474 = vpop.f32.mrf.mxu0
        %v475 = vadd.f32 %v335, %v474
        %476 = vmatmul.bf16.gmra.mxu0 %v393
        %v477 = vpop.f32.mrf.mxu0
        %v478 = vadd.f32 %v335, %v477
        %v479 = vpop.f32.mrf.mxu0
        %v480 = vadd.f32 %v335, %v479
        %481 = vmatmul.bf16.gmra.mxu0 %v396
        %v482 = vpop.f32.mrf.mxu0
        %v483 = vadd.f32 %v335, %v482
        %v484 = vpop.f32.mrf.mxu0
        %v485 = vadd.f32 %v335, %v484
        %486 = vdwg.mxu0
        %v487 = vpack.c.bf16 %v408, %v408
        %v488 = vpack.c.bf16 %v410, %v410
        %v489 = vpack.c.bf16 %v413, %v413
        %v490 = vpack.c.bf16 %v415, %v415
        %v491 = vpack.c.bf16 %v418, %v418
        %v492 = vpack.c.bf16 %v420, %v420
        %v493 = vpack.c.bf16 %v423, %v423
        %v494 = vpack.c.bf16 %v425, %v425
        %v495 = vpack.c.bf16 %v428, %v428
        %v496 = vpack.c.bf16 %v430, %v430
        %v497 = vpack.c.bf16 %v433, %v433
        %v498 = vpack.c.bf16 %v435, %v435
        %v499 = vpack.c.bf16 %v438, %v438
        %v500 = vpack.c.bf16 %v440, %v440
        %v501 = vpack.c.bf16 %v443, %v443
        %v502 = vpack.c.bf16 %v445, %v445
        %v503 = vpack.c.bf16 %v448, %v448
        %v504 = vpack.c.bf16 %v450, %v450
        %v505 = vpack.c.bf16 %v453, %v453
        %v506 = vpack.c.bf16 %v455, %v455
        %v507 = vpack.c.bf16 %v458, %v458
        %v508 = vpack.c.bf16 %v460, %v460
        %v509 = vpack.c.bf16 %v463, %v463
        %v510 = vpack.c.bf16 %v465, %v465
        %v511 = vpack.c.bf16 %v468, %v468
        %v512 = vpack.c.bf16 %v470, %v470
        %v513 = vpack.c.bf16 %v473, %v473
        %v514 = vpack.c.bf16 %v475, %v475
        %v515 = vpack.c.bf16 %v478, %v478
        %v516 = vpack.c.bf16 %v480, %v480
        %v517 = vpack.c.bf16 %v483, %v483
        %v518 = vpack.c.bf16 %v485, %v485
        %vm519 = vcmask 257024
        %520 = vst.msk [vmem:[#allocation2] sm:$0xf] %vm519, %v487
        %521 = vst.msk [vmem:[#allocation2 + $0x4] sm:$0xf] %vm519, %v488
        %522 = vst.msk [vmem:[#allocation2 + $0x8] sm:$0xf] %vm519, %v489
        %523 = vst.msk [vmem:[#allocation2 + $0xc] sm:$0xf] %vm519, %v490
        %524 = vst.msk [vmem:[#allocation2 + $0x10] sm:$0xf] %vm519, %v491
        %525 = vst.msk [vmem:[#allocation2 + $0x14] sm:$0xf] %vm519, %v492
        %526 = vst.msk [vmem:[#allocation2 + $0x18] sm:$0xf] %vm519, %v493
        %527 = vst.msk [vmem:[#allocation2 + $0x1c] sm:$0xf] %vm519, %v494
        %528 = vst.msk [vmem:[#allocation2 + $0x20] sm:$0xf] %vm519, %v495
        %529 = vst.msk [vmem:[#allocation2 + $0x24] sm:$0xf] %vm519, %v496
        %530 = vst.msk [vmem:[#allocation2 + $0x28] sm:$0xf] %vm519, %v497
        %531 = vst.msk [vmem:[#allocation2 + $0x2c] sm:$0xf] %vm519, %v498
        %532 = vst.msk [vmem:[#allocation2 + $0x30] sm:$0xf] %vm519, %v499
        %533 = vst.msk [vmem:[#allocation2 + $0x34] sm:$0xf] %vm519, %v500
        %534 = vst.msk [vmem:[#allocation2 + $0x38] sm:$0xf] %vm519, %v501
        %535 = vst.msk [vmem:[#allocation2 + $0x3c] sm:$0xf] %vm519, %v502
        %536 = vst.msk [vmem:[#allocation2 + $0x40] sm:$0xf] %vm519, %v503
        %537 = vst.msk [vmem:[#allocation2 + $0x44] sm:$0xf] %vm519, %v504
        %538 = vst.msk [vmem:[#allocation2 + $0x48] sm:$0xf] %vm519, %v505
        %539 = vst.msk [vmem:[#allocation2 + $0x4c] sm:$0xf] %vm519, %v506
        %540 = vst.msk [vmem:[#allocation2 + $0x50] sm:$0xf] %vm519, %v507
        %541 = vst.msk [vmem:[#allocation2 + $0x54] sm:$0xf] %vm519, %v508
        %542 = vst.msk [vmem:[#allocation2 + $0x58] sm:$0xf] %vm519, %v509
        %543 = vst.msk [vmem:[#allocation2 + $0x5c] sm:$0xf] %vm519, %v510
        %544 = vst.msk [vmem:[#allocation2 + $0x60] sm:$0xf] %vm519, %v511
        %545 = vst.msk [vmem:[#allocation2 + $0x64] sm:$0xf] %vm519, %v512
        %546 = vst.msk [vmem:[#allocation2 + $0x68] sm:$0xf] %vm519, %v513
        %547 = vst.msk [vmem:[#allocation2 + $0x6c] sm:$0xf] %vm519, %v514
        %548 = vst.msk [vmem:[#allocation2 + $0x70] sm:$0xf] %vm519, %v515
        %549 = vst.msk [vmem:[#allocation2 + $0x74] sm:$0xf] %vm519, %v516
        %550 = vst.msk [vmem:[#allocation2 + $0x78] sm:$0xf] %vm519, %v517
        %551 = vst.msk [vmem:[#allocation2 + $0x7c] sm:$0xf] %vm519, %v518
      $region48: #{tpu_custom_call.1} parent=43 // pred_fallthru
        _
      %s552 = smul.u32 %s23, 128
      %s553 = scalar_lea.vmem %s265, %s552
      %v554 = vld [vmem:[%s553] sm:$0xff]
      %v555 = vld [vmem:[%s553 + $0x8] sm:$0xff]
      %v556 = vld [vmem:[%s553 + $0x10] sm:$0xff]
      %v557 = vld [vmem:[%s553 + $0x18] sm:$0xff]
      %v558 = vld [vmem:[%s553 + $0x20] sm:$0xff]
      %v559 = vld [vmem:[%s553 + $0x28] sm:$0xff]
      %v560 = vld [vmem:[%s553 + $0x30] sm:$0xff]
      %v561 = vld [vmem:[%s553 + $0x38] sm:$0xff]
      %v562 = vld [vmem:[%s553 + $0x40] sm:$0xff]
      %v563 = vld [vmem:[%s553 + $0x48] sm:$0xff]
      %v564 = vld [vmem:[%s553 + $0x50] sm:$0xff]
      %v565 = vld [vmem:[%s553 + $0x58] sm:$0xff]
      %v566 = vld [vmem:[%s553 + $0x60] sm:$0xff]
      %v567 = vld [vmem:[%s553 + $0x68] sm:$0xff]
      %v568 = vld [vmem:[%s553 + $0x70] sm:$0xff]
      %v569 = vld [vmem:[%s553 + $0x78] sm:$0xff]
      %v570 = vpack.c.bf16 %v555, %v554
      %v571 = vpack.c.bf16 %v557, %v556
      %v572 = vpack.c.bf16 %v559, %v558
      %v573 = vpack.c.bf16 %v561, %v560
      %v574 = vpack.c.bf16 %v563, %v562
      %v575 = vpack.c.bf16 %v565, %v564
      %v576 = vpack.c.bf16 %v567, %v566
      %v577 = vpack.c.bf16 %v569, %v568
      %v578 = vld [vmem:[%s2] sm:$0xf]
      %v579 = vld [vmem:[%s2 + $0x4] sm:$0xf]
      %v580 = vld [vmem:[%s2 + $0x8] sm:$0xf]
      %v581 = vld [vmem:[%s2 + $0xc] sm:$0xf]
      %v582 = vld [vmem:[%s3] sm:$0x1]
      %v584 = vperm.slane %v582, 0
      %v590 = vunpack.c.l.b16 %v578
      %v591 = vunpack.c.l.b16 %v579
      %v592 = vunpack.c.l.b16 %v580
      %v593 = vunpack.c.l.b16 %v581
      %v594 = vpack.c.b16 %v591, %v590
      %v595 = vpack.c.b16 %v593, %v592
      %vm598 = vcmask 261120
      %v600 = vsel %vm598, %v570, 0
      %v603 = vsel %vm598, %v571, 0
      %v606 = vsel %vm598, %v572, 0
      %v609 = vsel %vm598, %v573, 0
      %v612 = vsel %vm598, %v574, 0
      %v615 = vsel %vm598, %v575, 0
      %v618 = vsel %vm598, %v576, 0
      %v621 = vsel %vm598, %v577, 0
      %623 = vmatpush.bf16.msra.mxu0 0
      %624 = vmatpush.bf16.msra.mxu0 0
      %625 = vmatpush.bf16.msra.mxu0 0
      %626 = vmatpush.bf16.msra.mxu0 0
      %627 = vmatpush.bf16.msra.mxu0 0
      %628 = vmatpush.bf16.msra.mxu0 0
      %629 = vmatpush.bf16.msra.mxu0 %v595
      %630 = vmatpush.bf16.msra.mxu0 %v594
      %631 = vmatmul.bf16.gmra.mxu0 %v600
      %v632 = vpop.f32.mrf.mxu0
      %v633 = vadd.f32 %v584, %v632
      %v634 = vpop.f32.mrf.mxu0
      %v635 = vadd.f32 %v584, %v634
      %636 = vmatmul.bf16.gmra.mxu0 %v603
      %v637 = vpop.f32.mrf.mxu0
      %v638 = vadd.f32 %v584, %v637
      %v639 = vpop.f32.mrf.mxu0
      %v640 = vadd.f32 %v584, %v639
      %641 = vmatmul.bf16.gmra.mxu0 %v606
      %v642 = vpop.f32.mrf.mxu0
      %v643 = vadd.f32 %v584, %v642
      %v644 = vpop.f32.mrf.mxu0
      %v645 = vadd.f32 %v584, %v644
      %646 = vmatmul.bf16.gmra.mxu0 %v609
      %v647 = vpop.f32.mrf.mxu0
      %v648 = vadd.f32 %v584, %v647
      %v649 = vpop.f32.mrf.mxu0
      %v650 = vadd.f32 %v584, %v649
      %651 = vmatmul.bf16.gmra.mxu0 %v612
      %v652 = vpop.f32.mrf.mxu0
      %v653 = vadd.f32 %v584, %v652
      %v654 = vpop.f32.mrf.mxu0
      %v655 = vadd.f32 %v584, %v654
      %656 = vmatmul.bf16.gmra.mxu0 %v615
      %v657 = vpop.f32.mrf.mxu0
      %v658 = vadd.f32 %v584, %v657
      %v659 = vpop.f32.mrf.mxu0
      %v660 = vadd.f32 %v584, %v659
      %661 = vmatmul.bf16.gmra.mxu0 %v618
      %v662 = vpop.f32.mrf.mxu0
      %v663 = vadd.f32 %v584, %v662
      %v664 = vpop.f32.mrf.mxu0
      %v665 = vadd.f32 %v584, %v664
      %666 = vmatmul.bf16.gmra.mxu0 %v621
      %v667 = vpop.f32.mrf.mxu0
      %v668 = vadd.f32 %v584, %v667
      %v669 = vpop.f32.mrf.mxu0
      %v670 = vadd.f32 %v584, %v669
      %671 = vdwg.mxu0
      %v672 = vpack.c.bf16 %v635, %v633
      %v673 = vpack.c.bf16 %v640, %v638
      %v674 = vpack.c.bf16 %v645, %v643
      %v675 = vpack.c.bf16 %v650, %v648
      %v676 = vpack.c.bf16 %v655, %v653
      %v677 = vpack.c.bf16 %v660, %v658
      %v678 = vpack.c.bf16 %v665, %v663
      %v679 = vpack.c.bf16 %v670, %v668
      %v681 = vsel %vm598, %v672, 0
      %v684 = vsel %vm598, %v673, 0
      %v687 = vsel %vm598, %v674, 0
      %v690 = vsel %vm598, %v675, 0
      %v693 = vsel %vm598, %v676, 0
      %v696 = vsel %vm598, %v677, 0
      %v699 = vsel %vm598, %v678, 0
      %v702 = vsel %vm598, %v679, 0
      %v705 = vsel %vm598, %v309, 0
      %v708 = vsel %vm598, %v310, 0
      %v711 = vsel %vm598, %v311, 0
      %v714 = vsel %vm598, %v312, 0
      %v717 = vsel %vm598, %v313, 0
      %v720 = vsel %vm598, %v314, 0
      %v723 = vsel %vm598, %v315, 0
      %v726 = vsel %vm598, %v316, 0
      %v729 = vsel %vm598, %v317, 0
      %v732 = vsel %vm598, %v318, 0
      %v735 = vsel %vm598, %v319, 0
      %v738 = vsel %vm598, %v320, 0
      %v741 = vsel %vm598, %v321, 0
      %v744 = vsel %vm598, %v322, 0
      %v747 = vsel %vm598, %v323, 0
      %v750 = vsel %vm598, %v324, 0
      %752 = vmatpush.bf16.xpose.msra.mxu0 %v726
      %753 = vmatpush.bf16.xpose.msra.mxu0 %v723
      %754 = vmatpush.bf16.xpose.msra.mxu0 %v720
      %755 = vmatpush.bf16.xpose.msra.mxu0 %v717
      %756 = vmatpush.bf16.xpose.msra.mxu0 %v714
      %757 = vmatpush.bf16.xpose.msra.mxu0 %v711
      %758 = vmatpush.bf16.xpose.msra.mxu0 %v708
      %759 = vmatpush.bf16.xpose.msra.mxu0 %v705
      %760 = vmatmul.bf16.gmra.mxu0 %v681
      %v761 = vpop.f32.mrf.mxu0
      %v762 = vadd.f32 0.0, %v761
      %v763 = vpop.f32.mrf.mxu0
      %v764 = vadd.f32 0.0, %v763
      %765 = vmatmul.bf16.gmra.mxu0 %v684
      %v766 = vpop.f32.mrf.mxu0
      %v767 = vadd.f32 0.0, %v766
      %v768 = vpop.f32.mrf.mxu0
      %v769 = vadd.f32 0.0, %v768
      %770 = vmatmul.bf16.gmra.mxu0 %v687
      %v771 = vpop.f32.mrf.mxu0
      %v772 = vadd.f32 0.0, %v771
      %v773 = vpop.f32.mrf.mxu0
      %v774 = vadd.f32 0.0, %v773
      %775 = vmatmul.bf16.gmra.mxu0 %v690
      %v776 = vpop.f32.mrf.mxu0
      %v777 = vadd.f32 0.0, %v776
      %v778 = vpop.f32.mrf.mxu0
      %v779 = vadd.f32 0.0, %v778
      %780 = vmatmul.bf16.gmra.mxu0 %v693
      %v781 = vpop.f32.mrf.mxu0
      %v782 = vadd.f32 0.0, %v781
      %v783 = vpop.f32.mrf.mxu0
      %v784 = vadd.f32 0.0, %v783
      %785 = vmatmul.bf16.gmra.mxu0 %v696
      %v786 = vpop.f32.mrf.mxu0
      %v787 = vadd.f32 0.0, %v786
      %v788 = vpop.f32.mrf.mxu0
      %v789 = vadd.f32 0.0, %v788
      %790 = vmatmul.bf16.gmra.mxu0 %v699
      %v791 = vpop.f32.mrf.mxu0
      %v792 = vadd.f32 0.0, %v791
      %v793 = vpop.f32.mrf.mxu0
      %v794 = vadd.f32 0.0, %v793
      %795 = vmatmul.bf16.gmra.mxu0 %v702
      %v796 = vpop.f32.mrf.mxu0
      %v797 = vadd.f32 0.0, %v796
      %v798 = vpop.f32.mrf.mxu0
      %v799 = vadd.f32 0.0, %v798
      %800 = vdwg.mxu0
      %801 = vmatpush.bf16.xpose.msra.mxu0 %v750
      %802 = vmatpush.bf16.xpose.msra.mxu0 %v747
      %803 = vmatpush.bf16.xpose.msra.mxu0 %v744
      %804 = vmatpush.bf16.xpose.msra.mxu0 %v741
      %805 = vmatpush.bf16.xpose.msra.mxu0 %v738
      %806 = vmatpush.bf16.xpose.msra.mxu0 %v735
      %807 = vmatpush.bf16.xpose.msra.mxu0 %v732
      %808 = vmatpush.bf16.xpose.msra.mxu0 %v729
      %809 = vmatmul.bf16.gmra.mxu0 %v681
      %v810 = vpop.f32.mrf.mxu0
      %v811 = vadd.f32 0.0, %v810
      %v812 = vpop.f32.mrf.mxu0
      %v813 = vadd.f32 0.0, %v812
      %814 = vmatmul.bf16.gmra.mxu0 %v684
      %v815 = vpop.f32.mrf.mxu0
      %v816 = vadd.f32 0.0, %v815
      %v817 = vpop.f32.mrf.mxu0
      %v818 = vadd.f32 0.0, %v817
      %819 = vmatmul.bf16.gmra.mxu0 %v687
      %v820 = vpop.f32.mrf.mxu0
      %v821 = vadd.f32 0.0, %v820
      %v822 = vpop.f32.mrf.mxu0
      %v823 = vadd.f32 0.0, %v822
      %824 = vmatmul.bf16.gmra.mxu0 %v690
      %v825 = vpop.f32.mrf.mxu0
      %v826 = vadd.f32 0.0, %v825
      %v827 = vpop.f32.mrf.mxu0
      %v828 = vadd.f32 0.0, %v827
      %829 = vmatmul.bf16.gmra.mxu0 %v693
      %v830 = vpop.f32.mrf.mxu0
      %v831 = vadd.f32 0.0, %v830
      %v832 = vpop.f32.mrf.mxu0
      %v833 = vadd.f32 0.0, %v832
      %834 = vmatmul.bf16.gmra.mxu0 %v696
      %v835 = vpop.f32.mrf.mxu0
      %v836 = vadd.f32 0.0, %v835
      %v837 = vpop.f32.mrf.mxu0
      %v838 = vadd.f32 0.0, %v837
      %839 = vmatmul.bf16.gmra.mxu0 %v699
      %v840 = vpop.f32.mrf.mxu0
      %v841 = vadd.f32 0.0, %v840
      %v842 = vpop.f32.mrf.mxu0
      %v843 = vadd.f32 0.0, %v842
      %844 = vmatmul.bf16.gmra.mxu0 %v702
      %v845 = vpop.f32.mrf.mxu0
      %v846 = vadd.f32 0.0, %v845
      %v847 = vpop.f32.mrf.mxu0
      %v848 = vadd.f32 0.0, %v847
      %849 = vdwg.mxu0
      %v850 = vmax.f32 %v762, %v811
      %851 = vmax.xlane.f32.xlu0 %v850
      %v852 = vpop.xlane.xlu0 %851
      %v853 = vmax.f32 %v764, %v813
      %854 = vmax.xlane.f32.xlu0 %v853
      %v855 = vpop.xlane.xlu0 %854
      %v856 = vmax.f32 %v767, %v816
      %857 = vmax.xlane.f32.xlu0 %v856
      %v858 = vpop.xlane.xlu0 %857
      %v859 = vmax.f32 %v769, %v818
      %860 = vmax.xlane.f32.xlu0 %v859
      %v861 = vpop.xlane.xlu0 %860
      %v862 = vmax.f32 %v772, %v821
      %863 = vmax.xlane.f32.xlu0 %v862
      %v864 = vpop.xlane.xlu0 %863
      %v865 = vmax.f32 %v774, %v823
      %866 = vmax.xlane.f32.xlu0 %v865
      %v867 = vpop.xlane.xlu0 %866
      %v868 = vmax.f32 %v777, %v826
      %869 = vmax.xlane.f32.xlu0 %v868
      %v870 = vpop.xlane.xlu0 %869
      %v871 = vmax.f32 %v779, %v828
      %872 = vmax.xlane.f32.xlu0 %v871
      %v873 = vpop.xlane.xlu0 %872
      %v874 = vmax.f32 %v782, %v831
      %875 = vmax.xlane.f32.xlu0 %v874
      %v876 = vpop.xlane.xlu0 %875
      %v877 = vmax.f32 %v784, %v833
      %878 = vmax.xlane.f32.xlu0 %v877
      %v879 = vpop.xlane.xlu0 %878
      %v880 = vmax.f32 %v787, %v836
      %881 = vmax.xlane.f32.xlu0 %v880
      %v882 = vpop.xlane.xlu0 %881
      %v883 = vmax.f32 %v789, %v838
      %884 = vmax.xlane.f32.xlu0 %v883
      %v885 = vpop.xlane.xlu0 %884
      %v886 = vmax.f32 %v792, %v841
      %887 = vmax.xlane.f32.xlu0 %v886
      %v888 = vpop.xlane.xlu0 %887
      %v889 = vmax.f32 %v794, %v843
      %890 = vmax.xlane.f32.xlu0 %v889
      %v891 = vpop.xlane.xlu0 %890
      %v892 = vmax.f32 %v797, %v846
      %893 = vmax.xlane.f32.xlu0 %v892
      %v894 = vpop.xlane.xlu0 %893
      %v895 = vmax.f32 %v799, %v848
      %896 = vmax.xlane.f32.xlu0 %v895
      %v897 = vpop.xlane.xlu0 %896
      %v898 = vsub.f32 %v762, %v852
      %v899 = vsub.f32 %v811, %v852
      %v900 = vsub.f32 %v764, %v855
      %v901 = vsub.f32 %v813, %v855
      %v902 = vsub.f32 %v767, %v858
      %v903 = vsub.f32 %v816, %v858
      %v904 = vsub.f32 %v769, %v861
      %v905 = vsub.f32 %v818, %v861
      %v906 = vsub.f32 %v772, %v864
      %v907 = vsub.f32 %v821, %v864
      %v908 = vsub.f32 %v774, %v867
      %v909 = vsub.f32 %v823, %v867
      %v910 = vsub.f32 %v777, %v870
      %v911 = vsub.f32 %v826, %v870
      %v912 = vsub.f32 %v779, %v873
      %v913 = vsub.f32 %v828, %v873
      %v914 = vsub.f32 %v782, %v876
      %v915 = vsub.f32 %v831, %v876
      %v916 = vsub.f32 %v784, %v879
      %v917 = vsub.f32 %v833, %v879
      %v918 = vsub.f32 %v787, %v882
      %v919 = vsub.f32 %v836, %v882
      %v920 = vsub.f32 %v789, %v885
      %v921 = vsub.f32 %v838, %v885
      %v922 = vsub.f32 %v792, %v888
      %v923 = vsub.f32 %v841, %v888
      %v924 = vsub.f32 %v794, %v891
      %v925 = vsub.f32 %v843, %v891
      %v926 = vsub.f32 %v797, %v894
      %v927 = vsub.f32 %v846, %v894
      %v928 = vsub.f32 %v799, %v897
      %v929 = vsub.f32 %v848, %v897
      %v930 = vmul.f32 %v898, 1.442695
      %v931 = vpow.pop %v930
      %v932 = vmul.f32 %v899, 1.442695
      %v933 = vpow.pop %v932
      %v934 = vmul.f32 %v900, 1.442695
      %v935 = vpow.pop %v934
      %v936 = vmul.f32 %v901, 1.442695
      %v937 = vpow.pop %v936
      %v938 = vmul.f32 %v902, 1.442695
      %v939 = vpow.pop %v938
      %v940 = vmul.f32 %v903, 1.442695
      %v941 = vpow.pop %v940
      %v942 = vmul.f32 %v904, 1.442695
      %v943 = vpow.pop %v942
      %v944 = vmul.f32 %v905, 1.442695
      %v945 = vpow.pop %v944
      %v946 = vmul.f32 %v906, 1.442695
      %v947 = vpow.pop %v946
      %v948 = vmul.f32 %v907, 1.442695
      %v949 = vpow.pop %v948
      %v950 = vmul.f32 %v908, 1.442695
      %v951 = vpow.pop %v950
      %v952 = vmul.f32 %v909, 1.442695
      %v953 = vpow.pop %v952
      %v954 = vmul.f32 %v910, 1.442695
      %v955 = vpow.pop %v954
      %v956 = vmul.f32 %v911, 1.442695
      %v957 = vpow.pop %v956
      %v958 = vmul.f32 %v912, 1.442695
      %v959 = vpow.pop %v958
      %v960 = vmul.f32 %v913, 1.442695
      %v961 = vpow.pop %v960
      %v962 = vmul.f32 %v914, 1.442695
      %v963 = vpow.pop %v962
      %v964 = vmul.f32 %v915, 1.442695
      %v965 = vpow.pop %v964
      %v966 = vmul.f32 %v916, 1.442695
      %v967 = vpow.pop %v966
      %v968 = vmul.f32 %v917, 1.442695
      %v969 = vpow.pop %v968
      %v970 = vmul.f32 %v918, 1.442695
      %v971 = vpow.pop %v970
      %v972 = vmul.f32 %v919, 1.442695
      %v973 = vpow.pop %v972
      %v974 = vmul.f32 %v920, 1.442695
      %v975 = vpow.pop %v974
      %v976 = vmul.f32 %v921, 1.442695
      %v977 = vpow.pop %v976
      %v978 = vmul.f32 %v922, 1.442695
      %v979 = vpow.pop %v978
      %v980 = vmul.f32 %v923, 1.442695
      %v981 = vpow.pop %v980
      %v982 = vmul.f32 %v924, 1.442695
      %v983 = vpow.pop %v982
      %v984 = vmul.f32 %v925, 1.442695
      %v985 = vpow.pop %v984
      %v986 = vmul.f32 %v926, 1.442695
      %v987 = vpow.pop %v986
      %v988 = vmul.f32 %v927, 1.442695
      %v989 = vpow.pop %v988
      %v990 = vmul.f32 %v928, 1.442695
      %v991 = vpow.pop %v990
      %v992 = vmul.f32 %v929, 1.442695
      %v993 = vpow.pop %v992
      %v994 = vadd.f32 %v931, %v933
      %995 = vadd.xlane.f32.xlu0 %v994
      %v996 = vpop.xlane.xlu0 %995
      %v997 = vadd.f32 %v935, %v937
      %998 = vadd.xlane.f32.xlu0 %v997
      %v999 = vpop.xlane.xlu0 %998
      %v1000 = vadd.f32 %v939, %v941
      %1001 = vadd.xlane.f32.xlu0 %v1000
      %v1002 = vpop.xlane.xlu0 %1001
      %v1003 = vadd.f32 %v943, %v945
      %1004 = vadd.xlane.f32.xlu0 %v1003
      %v1005 = vpop.xlane.xlu0 %1004
      %v1006 = vadd.f32 %v947, %v949
      %1007 = vadd.xlane.f32.xlu0 %v1006
      %v1008 = vpop.xlane.xlu0 %1007
      %v1009 = vadd.f32 %v951, %v953
      %1010 = vadd.xlane.f32.xlu0 %v1009
      %v1011 = vpop.xlane.xlu0 %1010
      %v1012 = vadd.f32 %v955, %v957
      %1013 = vadd.xlane.f32.xlu0 %v1012
      %v1014 = vpop.xlane.xlu0 %1013
      %v1015 = vadd.f32 %v959, %v961
      %1016 = vadd.xlane.f32.xlu0 %v1015
      %v1017 = vpop.xlane.xlu0 %1016
      %v1018 = vadd.f32 %v963, %v965
      %1019 = vadd.xlane.f32.xlu0 %v1018
      %v1020 = vpop.xlane.xlu0 %1019
      %v1021 = vadd.f32 %v967, %v969
      %1022 = vadd.xlane.f32.xlu0 %v1021
      %v1023 = vpop.xlane.xlu0 %1022
      %v1024 = vadd.f32 %v971, %v973
      %1025 = vadd.xlane.f32.xlu0 %v1024
      %v1026 = vpop.xlane.xlu0 %1025
      %v1027 = vadd.f32 %v975, %v977
      %1028 = vadd.xlane.f32.xlu0 %v1027
      %v1029 = vpop.xlane.xlu0 %1028
      %v1030 = vadd.f32 %v979, %v981
      %1031 = vadd.xlane.f32.xlu0 %v1030
      %v1032 = vpop.xlane.xlu0 %1031
      %v1033 = vadd.f32 %v983, %v985
      %1034 = vadd.xlane.f32.xlu0 %v1033
      %v1035 = vpop.xlane.xlu0 %1034
      %v1036 = vadd.f32 %v987, %v989
      %1037 = vadd.xlane.f32.xlu0 %v1036
      %v1038 = vpop.xlane.xlu0 %1037
      %v1039 = vadd.f32 %v991, %v993
      %1040 = vadd.xlane.f32.xlu0 %v1039
      %v1041 = vpop.xlane.xlu0 %1040
      %v1042 = vrcp.pop %v996
      %v1043 = vrcp.pop %v999
      %v1044 = vrcp.pop %v1002
      %v1045 = vrcp.pop %v1005
      %v1046 = vrcp.pop %v1008
      %v1047 = vrcp.pop %v1011
      %v1048 = vrcp.pop %v1014
      %v1049 = vrcp.pop %v1017
      %v1050 = vrcp.pop %v1020
      %v1051 = vrcp.pop %v1023
      %v1052 = vrcp.pop %v1026
      %v1053 = vrcp.pop %v1029
      %v1054 = vrcp.pop %v1032
      %v1055 = vrcp.pop %v1035
      %v1056 = vrcp.pop %v1038
      %v1057 = vrcp.pop %v1041
      %v1058 = vmul.f32 %v931, %v1042
      %v1059 = vmul.f32 %v933, %v1042
      %v1060 = vmul.f32 %v935, %v1043
      %v1061 = vmul.f32 %v937, %v1043
      %v1062 = vmul.f32 %v939, %v1044
      %v1063 = vmul.f32 %v941, %v1044
      %v1064 = vmul.f32 %v943, %v1045
      %v1065 = vmul.f32 %v945, %v1045
      %v1066 = vmul.f32 %v947, %v1046
      %v1067 = vmul.f32 %v949, %v1046
      %v1068 = vmul.f32 %v951, %v1047
      %v1069 = vmul.f32 %v953, %v1047
      %v1070 = vmul.f32 %v955, %v1048
      %v1071 = vmul.f32 %v957, %v1048
      %v1072 = vmul.f32 %v959, %v1049
      %v1073 = vmul.f32 %v961, %v1049
      %v1074 = vmul.f32 %v963, %v1050
      %v1075 = vmul.f32 %v965, %v1050
      %v1076 = vmul.f32 %v967, %v1051
      %v1077 = vmul.f32 %v969, %v1051
      %v1078 = vmul.f32 %v971, %v1052
      %v1079 = vmul.f32 %v973, %v1052
      %v1080 = vmul.f32 %v975, %v1053
      %v1081 = vmul.f32 %v977, %v1053
      %v1082 = vmul.f32 %v979, %v1054
      %v1083 = vmul.f32 %v981, %v1054
      %v1084 = vmul.f32 %v983, %v1055
      %v1085 = vmul.f32 %v985, %v1055
      %v1086 = vmul.f32 %v987, %v1056
      %v1087 = vmul.f32 %v989, %v1056
      %v1088 = vmul.f32 %v991, %v1057
      %v1089 = vmul.f32 %v993, %v1057
      %v1090 = vpack.c.bf16 %v1060, %v1058
      %v1091 = vpack.c.bf16 %v1061, %v1059
      %v1092 = vpack.c.bf16 %v1064, %v1062
      %v1093 = vpack.c.bf16 %v1065, %v1063
      %v1094 = vpack.c.bf16 %v1068, %v1066
      %v1095 = vpack.c.bf16 %v1069, %v1067
      %v1096 = vpack.c.bf16 %v1072, %v1070
      %v1097 = vpack.c.bf16 %v1073, %v1071
      %v1098 = vpack.c.bf16 %v1076, %v1074
      %v1099 = vpack.c.bf16 %v1077, %v1075
      %v1100 = vpack.c.bf16 %v1080, %v1078
      %v1101 = vpack.c.bf16 %v1081, %v1079
      %v1102 = vpack.c.bf16 %v1084, %v1082
      %v1103 = vpack.c.bf16 %v1085, %v1083
      %v1104 = vpack.c.bf16 %v1088, %v1086
      %v1105 = vpack.c.bf16 %v1089, %v1087
      %v1106 = vld [vmem:[#allocation2] sm:$0xf]
      %v1107 = vld [vmem:[#allocation2 + $0x4] sm:$0xf]
      %v1108 = vld [vmem:[#allocation2 + $0x8] sm:$0xf]
      %v1109 = vld [vmem:[#allocation2 + $0xc] sm:$0xf]
      %v1110 = vld [vmem:[#allocation2 + $0x10] sm:$0xf]
      %v1111 = vld [vmem:[#allocation2 + $0x14] sm:$0xf]
      %v1112 = vld [vmem:[#allocation2 + $0x18] sm:$0xf]
      %v1113 = vld [vmem:[#allocation2 + $0x1c] sm:$0xf]
      %v1114 = vld [vmem:[#allocation2 + $0x20] sm:$0xf]
      %v1115 = vld [vmem:[#allocation2 + $0x24] sm:$0xf]
      %v1116 = vld [vmem:[#allocation2 + $0x28] sm:$0xf]
      %v1117 = vld [vmem:[#allocation2 + $0x2c] sm:$0xf]
      %v1118 = vld [vmem:[#allocation2 + $0x30] sm:$0xf]
      %v1119 = vld [vmem:[#allocation2 + $0x34] sm:$0xf]
      %v1120 = vld [vmem:[#allocation2 + $0x38] sm:$0xf]
      %v1121 = vld [vmem:[#allocation2 + $0x3c] sm:$0xf]
      %v1122 = vld [vmem:[#allocation2 + $0x40] sm:$0xf]
      %v1123 = vld [vmem:[#allocation2 + $0x44] sm:$0xf]
      %v1124 = vld [vmem:[#allocation2 + $0x48] sm:$0xf]
      %v1125 = vld [vmem:[#allocation2 + $0x4c] sm:$0xf]
      %v1126 = vld [vmem:[#allocation2 + $0x50] sm:$0xf]
      %v1127 = vld [vmem:[#allocation2 + $0x54] sm:$0xf]
      %v1128 = vld [vmem:[#allocation2 + $0x58] sm:$0xf]
      %v1129 = vld [vmem:[#allocation2 + $0x5c] sm:$0xf]
      %v1130 = vld [vmem:[#allocation2 + $0x60] sm:$0xf]
      %v1131 = vld [vmem:[#allocation2 + $0x64] sm:$0xf]
      %v1132 = vld [vmem:[#allocation2 + $0x68] sm:$0xf]
      %v1133 = vld [vmem:[#allocation2 + $0x6c] sm:$0xf]
      %v1134 = vld [vmem:[#allocation2 + $0x70] sm:$0xf]
      %v1135 = vld [vmem:[#allocation2 + $0x74] sm:$0xf]
      %v1136 = vld [vmem:[#allocation2 + $0x78] sm:$0xf]
      %v1137 = vld [vmem:[#allocation2 + $0x7c] sm:$0xf]
      %v1170 = vunpack.c.l.b16 %v1106
      %v1171 = vunpack.c.l.b16 %v1107
      %v1172 = vunpack.c.l.b16 %v1108
      %v1173 = vunpack.c.l.b16 %v1109
      %v1174 = vunpack.c.l.b16 %v1110
      %v1175 = vunpack.c.l.b16 %v1111
      %v1176 = vunpack.c.l.b16 %v1112
      %v1177 = vunpack.c.l.b16 %v1113
      %v1178 = vunpack.c.l.b16 %v1114
      %v1179 = vunpack.c.l.b16 %v1115
      %v1180 = vunpack.c.l.b16 %v1116
      %v1181 = vunpack.c.l.b16 %v1117
      %v1182 = vunpack.c.l.b16 %v1118
      %v1183 = vunpack.c.l.b16 %v1119
      %v1184 = vunpack.c.l.b16 %v1120
      %v1185 = vunpack.c.l.b16 %v1121
      %v1186 = vunpack.c.l.b16 %v1122
      %v1187 = vunpack.c.l.b16 %v1123
      %v1188 = vunpack.c.l.b16 %v1124
      %v1189 = vunpack.c.l.b16 %v1125
      %v1190 = vunpack.c.l.b16 %v1126
      %v1191 = vunpack.c.l.b16 %v1127
      %v1192 = vunpack.c.l.b16 %v1128
      %v1193 = vunpack.c.l.b16 %v1129
      %v1194 = vunpack.c.l.b16 %v1130
      %v1195 = vunpack.c.l.b16 %v1131
      %v1196 = vunpack.c.l.b16 %v1132
      %v1197 = vunpack.c.l.b16 %v1133
      %v1198 = vunpack.c.l.b16 %v1134
      %v1199 = vunpack.c.l.b16 %v1135
      %v1200 = vunpack.c.l.b16 %v1136
      %v1201 = vunpack.c.l.b16 %v1137
      %v1202 = vpack.c.b16 %v1171, %v1170
      %v1203 = vpack.c.b16 %v1173, %v1172
      %v1204 = vpack.c.b16 %v1175, %v1174
      %v1205 = vpack.c.b16 %v1177, %v1176
      %v1206 = vpack.c.b16 %v1179, %v1178
      %v1207 = vpack.c.b16 %v1181, %v1180
      %v1208 = vpack.c.b16 %v1183, %v1182
      %v1209 = vpack.c.b16 %v1185, %v1184
      %v1210 = vpack.c.b16 %v1187, %v1186
      %v1211 = vpack.c.b16 %v1189, %v1188
      %v1212 = vpack.c.b16 %v1191, %v1190
      %v1213 = vpack.c.b16 %v1193, %v1192
      %v1214 = vpack.c.b16 %v1195, %v1194
      %v1215 = vpack.c.b16 %v1197, %v1196
      %v1216 = vpack.c.b16 %v1199, %v1198
      %v1217 = vpack.c.b16 %v1201, %v1200
      %1234 = vmatpush.bf16.msra.mxu0 %v1209
      %1235 = vmatpush.bf16.msra.mxu0 %v1208
      %1236 = vmatpush.bf16.msra.mxu0 %v1207
      %1237 = vmatpush.bf16.msra.mxu0 %v1206
      %1238 = vmatpush.bf16.msra.mxu0 %v1205
      %1239 = vmatpush.bf16.msra.mxu0 %v1204
      %1240 = vmatpush.bf16.msra.mxu0 %v1203
      %1241 = vmatpush.bf16.msra.mxu0 %v1202
      %1242 = vmatmul.bf16.gmra.mxu0 %v1090
      %v1243 = vpop.f32.mrf.mxu0
      %v1244 = vadd.f32 0.0, %v1243
      %v1245 = vpop.f32.mrf.mxu0
      %v1246 = vadd.f32 0.0, %v1245
      %1247 = vmatmul.bf16.gmra.mxu0 %v1092
      %v1248 = vpop.f32.mrf.mxu0
      %v1249 = vadd.f32 0.0, %v1248
      %v1250 = vpop.f32.mrf.mxu0
      %v1251 = vadd.f32 0.0, %v1250
      %1252 = vmatmul.bf16.gmra.mxu0 %v1094
      %v1253 = vpop.f32.mrf.mxu0
      %v1254 = vadd.f32 0.0, %v1253
      %v1255 = vpop.f32.mrf.mxu0
      %v1256 = vadd.f32 0.0, %v1255
      %1257 = vmatmul.bf16.gmra.mxu0 %v1096
      %v1258 = vpop.f32.mrf.mxu0
      %v1259 = vadd.f32 0.0, %v1258
      %v1260 = vpop.f32.mrf.mxu0
      %v1261 = vadd.f32 0.0, %v1260
      %1262 = vmatmul.bf16.gmra.mxu0 %v1098
      %v1263 = vpop.f32.mrf.mxu0
      %v1264 = vadd.f32 0.0, %v1263
      %v1265 = vpop.f32.mrf.mxu0
      %v1266 = vadd.f32 0.0, %v1265
      %1267 = vmatmul.bf16.gmra.mxu0 %v1100
      %v1268 = vpop.f32.mrf.mxu0
      %v1269 = vadd.f32 0.0, %v1268
      %v1270 = vpop.f32.mrf.mxu0
      %v1271 = vadd.f32 0.0, %v1270
      %1272 = vmatmul.bf16.gmra.mxu0 %v1102
      %v1273 = vpop.f32.mrf.mxu0
      %v1274 = vadd.f32 0.0, %v1273
      %v1275 = vpop.f32.mrf.mxu0
      %v1276 = vadd.f32 0.0, %v1275
      %1277 = vmatmul.bf16.gmra.mxu0 %v1104
      %v1278 = vpop.f32.mrf.mxu0
      %v1279 = vadd.f32 0.0, %v1278
      %v1280 = vpop.f32.mrf.mxu0
      %v1281 = vadd.f32 0.0, %v1280
      %1282 = vdwg.mxu0
      %1283 = vmatpush.bf16.msra.mxu0 %v1217
      %1284 = vmatpush.bf16.msra.mxu0 %v1216
      %1285 = vmatpush.bf16.msra.mxu0 %v1215
      %1286 = vmatpush.bf16.msra.mxu0 %v1214
      %1287 = vmatpush.bf16.msra.mxu0 %v1213
      %1288 = vmatpush.bf16.msra.mxu0 %v1212
      %1289 = vmatpush.bf16.msra.mxu0 %v1211
      %1290 = vmatpush.bf16.msra.mxu0 %v1210
      %1291 = vmatmul.bf16.gmra.mxu0 %v1091
      %v1292 = vpop.f32.mrf.mxu0
      %v1293 = vadd.f32 %v1244, %v1292
      %v1294 = vpop.f32.mrf.mxu0
      %v1295 = vadd.f32 %v1246, %v1294
      %1296 = vmatmul.bf16.gmra.mxu0 %v1093
      %v1297 = vpop.f32.mrf.mxu0
      %v1298 = vadd.f32 %v1249, %v1297
      %v1299 = vpop.f32.mrf.mxu0
      %v1300 = vadd.f32 %v1251, %v1299
      %1301 = vmatmul.bf16.gmra.mxu0 %v1095
      %v1302 = vpop.f32.mrf.mxu0
      %v1303 = vadd.f32 %v1254, %v1302
      %v1304 = vpop.f32.mrf.mxu0
      %v1305 = vadd.f32 %v1256, %v1304
      %1306 = vmatmul.bf16.gmra.mxu0 %v1097
      %v1307 = vpop.f32.mrf.mxu0
      %v1308 = vadd.f32 %v1259, %v1307
      %v1309 = vpop.f32.mrf.mxu0
      %v1310 = vadd.f32 %v1261, %v1309
      %1311 = vmatmul.bf16.gmra.mxu0 %v1099
      %v1312 = vpop.f32.mrf.mxu0
      %v1313 = vadd.f32 %v1264, %v1312
      %v1314 = vpop.f32.mrf.mxu0
      %v1315 = vadd.f32 %v1266, %v1314
      %1316 = vmatmul.bf16.gmra.mxu0 %v1101
      %v1317 = vpop.f32.mrf.mxu0
      %v1318 = vadd.f32 %v1269, %v1317
      %v1319 = vpop.f32.mrf.mxu0
      %v1320 = vadd.f32 %v1271, %v1319
      %1321 = vmatmul.bf16.gmra.mxu0 %v1103
      %v1322 = vpop.f32.mrf.mxu0
      %v1323 = vadd.f32 %v1274, %v1322
      %v1324 = vpop.f32.mrf.mxu0
      %v1325 = vadd.f32 %v1276, %v1324
      %1326 = vmatmul.bf16.gmra.mxu0 %v1105
      %v1327 = vpop.f32.mrf.mxu0
      %v1328 = vadd.f32 %v1279, %v1327
      %v1329 = vpop.f32.mrf.mxu0
      %v1330 = vadd.f32 %v1281, %v1329
      %1331 = vdwg.mxu0
      %s1332 = sld [smem:[#allocation3]]
      %v1333 = vstv %s1332
      %v1334 = vmul.f32 %v1333, %v1293
      %v1335 = vmul.f32 %v1333, %v1295
      %v1336 = vmul.f32 %v1333, %v1298
      %v1337 = vmul.f32 %v1333, %v1300
      %v1338 = vmul.f32 %v1333, %v1303
      %v1339 = vmul.f32 %v1333, %v1305
      %v1340 = vmul.f32 %v1333, %v1308
      %v1341 = vmul.f32 %v1333, %v1310
      %v1342 = vmul.f32 %v1333, %v1313
      %v1343 = vmul.f32 %v1333, %v1315
      %v1344 = vmul.f32 %v1333, %v1318
      %v1345 = vmul.f32 %v1333, %v1320
      %v1346 = vmul.f32 %v1333, %v1323
      %v1347 = vmul.f32 %v1333, %v1325
      %v1348 = vmul.f32 %v1333, %v1328
      %v1349 = vmul.f32 %v1333, %v1330
      %v1350 = vadd.f32 %v1334, %v554
      %v1351 = vadd.f32 %v1335, %v555
      %v1352 = vadd.f32 %v1336, %v556
      %v1353 = vadd.f32 %v1337, %v557
      %v1354 = vadd.f32 %v1338, %v558
      %v1355 = vadd.f32 %v1339, %v559
      %v1356 = vadd.f32 %v1340, %v560
      %v1357 = vadd.f32 %v1341, %v561
      %v1358 = vadd.f32 %v1342, %v562
      %v1359 = vadd.f32 %v1343, %v563
      %v1360 = vadd.f32 %v1344, %v564
      %v1361 = vadd.f32 %v1345, %v565
      %v1362 = vadd.f32 %v1346, %v566
      %v1363 = vadd.f32 %v1347, %v567
      %v1364 = vadd.f32 %v1348, %v568
      %v1365 = vadd.f32 %v1349, %v569
      %1366 = vst.msk [vmem:[%s274] sm:$0xff] %vm598, %v1350
      %1367 = vst.msk [vmem:[%s274 + $0x8] sm:$0xff] %vm598, %v1351
      %1368 = vst.msk [vmem:[%s274 + $0x10] sm:$0xff] %vm598, %v1352
      %1369 = vst.msk [vmem:[%s274 + $0x18] sm:$0xff] %vm598, %v1353
      %1370 = vst.msk [vmem:[%s274 + $0x20] sm:$0xff] %vm598, %v1354
      %1371 = vst.msk [vmem:[%s274 + $0x28] sm:$0xff] %vm598, %v1355
      %1372 = vst.msk [vmem:[%s274 + $0x30] sm:$0xff] %vm598, %v1356
      %1373 = vst.msk [vmem:[%s274 + $0x38] sm:$0xff] %vm598, %v1357
      %1374 = vst.msk [vmem:[%s274 + $0x40] sm:$0xff] %vm598, %v1358
      %1375 = vst.msk [vmem:[%s274 + $0x48] sm:$0xff] %vm598, %v1359
      %1376 = vst.msk [vmem:[%s274 + $0x50] sm:$0xff] %vm598, %v1360
      %1377 = vst.msk [vmem:[%s274 + $0x58] sm:$0xff] %vm598, %v1361
      %1378 = vst.msk [vmem:[%s274 + $0x60] sm:$0xff] %vm598, %v1362
      %1379 = vst.msk [vmem:[%s274 + $0x68] sm:$0xff] %vm598, %v1363
      %1380 = vst.msk [vmem:[%s274 + $0x70] sm:$0xff] %vm598, %v1364
      %1381 = vst.msk [vmem:[%s274 + $0x78] sm:$0xff] %vm598, %v1365
      %s1382 = smul.u32 16, %s23
      %p1383 = scmp.lt.s32.totalorder %s22, 1
      %s1384 = scalar_select %p1383, %s22, 1
      %p1385 = scmp.lt.s32.totalorder %s1382, 31
      %s1386 = scalar_select %p1385, %s1382, 31
      %s1387 = smul.addr %s1384, 32
      %s1388 = sadd.s32 %s1386, %s1387
      %s1389 = smul.addr %s1388, 8
      %s1390 = scalar_lea.vmem %s6, %s1389
      // Predicated region
      $region49: #{tpu_custom_call.1} parent=43 // pred_check
        %p1391 = pneg %p181
      $region50: #{tpu_custom_call.1} parent=43 // pred_check_branch
        %1393 = sbr.rel (%p1391) target = $region52
      $region51: #{tpu_custom_call.1} parent=43 // pred_region
        %s1394 = smul.u32 16, %s23
      $region52: #{tpu_custom_call.1} parent=43 // pred_fallthru
        _
    $region44: #{tpu_custom_call.1} parent=5 // pred_fallthru
      _
    %p1395 = scmp.le.s32.totalorder 2, %s13
    // Predicated region
    $region53: #{tpu_custom_call.1} parent=5 // pred_check
      %p1396 = pneg %p1395
    $region54: #{tpu_custom_call.1} parent=5 // pred_check_branch
      %1398 = sbr.rel (%p1396) target = $region56
    $region55: #{tpu_custom_call.1} parent=5 // pred_region
      %s1399 = ssub.s32 %s13, 2
      // Predicated region
      $region57: #{tpu_custom_call.1} parent=55 // pred_check
        %p1400 = pneg %p187
      $region58: #{tpu_custom_call.1} parent=55 // pred_check_branch
        %1402 = sbr.rel (%p1400) target = $region60
      $region59: #{tpu_custom_call.1} parent=55 // pred_region
        %s1403 = smul.u32 16, %s25
        %p1404 = scmp.lt.s32.totalorder %s24, 1
        %s1405 = scalar_select %p1404, %s24, 1
        %p1406 = scmp.lt.s32.totalorder %s1403, 31
        %s1407 = scalar_select %p1406, %s1403, 31
        %s1408 = smul.addr %s1405, 32
        %s1409 = sadd.s32 %s1407, %s1408
        %s1410 = smul.addr %s1409, 8
        %s1411 = scalar_lea.vmem %s6, %s1410
      $region60: #{tpu_custom_call.1} parent=55 // pred_fallthru
        _
    $region56: #{tpu_custom_call.1} parent=5 // pred_fallthru
      _
  $region6: #{tpu_custom_call.1} parent=0 // loop_footer
    %s17 = sadd.s32 1, %s13
  $region7: #{tpu_custom_call.1} parent=0 // loop_footer_branch
    %12 = sbr.rel target = $region3
  $region8: #{tpu_custom_call.1} parent=0 // loop_exit
    _

</llo_original>
